<compile_context>
chip_gen: v7x
topology: tpu7x:2x2x1
jax: 0.10.0
libtpu: 0.0.40
codegen_flags: <defaults>
</compile_context>

<pallas_src>
import numpy as np
import jax
import jax.numpy as jnp
from jax import lax
from jax.experimental import pallas as pl
from jax.experimental.pallas import tpu as pltpu


def _ceil_to(x, m):
    return ((x + m - 1) // m) * m


def _num_tensorcores():
    """Best-effort TensorCore count; 1 if unknown (v5e/v6e behaviour)."""
    try:
        info = pltpu.get_tpu_info()
    except Exception:
        return 1
    for name in ("num_cores", "core_count", "num_tensorcores", "tensor_core_count"):
        v = getattr(info, name, None)
        if isinstance(v, int) and v > 0:
            return v
    return 1


def _vmem_capacity_bytes():
    """Physical VMEM per core; conservative v7x figure if unknown."""
    try:
        v = int(pltpu.get_tpu_info().vmem_capacity_bytes)
        if v > 0:
            return v
    except Exception:
        pass
    return 64 * 1024 * 1024


def _planes_per_block(planes, plane_bytes, target_bytes, num_cores=1):
    """Largest divisor of `planes` whose f32 block fits the per-step budget.

    The even-block-count preference (for megacore sharding of the "parallel"
    grid axis) is only applied when the chip actually has >1 TensorCore.
    """
    fitting = [d for d in range(1, planes + 1)
               if planes % d == 0 and d * plane_bytes <= target_bytes]
    if not fitting:
        return 1
    best = max(fitting)
    if num_cores > 1:
        nblk = planes // best
        if nblk % num_cores != 0:
            aligned = [d for d in fitting if (planes // d) % num_cores == 0]
            if aligned:
                best = max(aligned)
    return best


def _strip_rows(h_pad, ws, budget_bytes=16 * 1024):
    """Rows per compute strip: keep each (rows, Ws) f32 intermediate ~<=16 KiB
    so the ~10 live stencil arrays stay inside the 256 KiB vreg file."""
    max_rows = max(8, (budget_bytes // (ws * 4)) // 8 * 8)
    if h_pad <= max_rows:
        return h_pad
    best = 8
    for d in range(8, max_rows + 1, 8):
        if h_pad % d == 0:
            best = d
    return best


def _make_kernel(*, H, W, H_pad, R, n_strips):
    """Builds the grid-step kernel for static image geometry."""
    mask_rows = (H_pad != H)

    def kernel(fuse_ref, ir_ref, out_ref, padf_ref, padr_ref):
        P = fuse_ref.shape[0]
        Ws = padf_ref.shape[1]

        # Zero ONLY the halo ring (+ the <=8 fake bottom rows) once per grid
        # step.  The interior is fully overwritten by every plane store and the
        # rest of the scratch is never read.  Re-zeroing every step (instead of
        # only at program_id==0) keeps the "parallel" axis safe on megacore.
        for ref in (padf_ref, padr_ref):
            ref[0:1, :] = jnp.zeros((1, Ws), jnp.float32)
            ref[H + 1:H_pad + 2, :] = jnp.zeros((H_pad + 1 - H, Ws), jnp.float32)
            ref[0:H_pad + 2, 0:1] = jnp.zeros((H_pad + 2, 1), jnp.float32)
            ref[0:H_pad + 2, W + 1:W + 2] = jnp.zeros((H_pad + 2, 1), jnp.float32)

        out_ref[...] = jnp.zeros_like(out_ref)

        # Hoisted iota for the fake-bottom-row mask (only built if needed).
        base_rows = (lax.broadcasted_iota(jnp.int32, (R, W), 0)
                     if mask_rows else None)

        def strip(r0):
            def sobel_mag(pad_ref):
                # (R+2, W+2) padded window sliced straight from the Ref — no
                # full-scratch load, no dead-region bytes.
                pv = pad_ref[pl.ds(r0, R + 2), 0:W + 2]
                c0 = pv[:, 0:W]
                c1 = pv[:, 1:W + 1]
                c2 = pv[:, 2:W + 2]
                t1 = c2 - c0                      # horizontal diff   [-1, 0, 1]
                t2 = c0 + 2.0 * c1 + c2           # horizontal smooth [ 1, 2, 1]
                gx = t1[0:R] + 2.0 * t1[1:R + 1] + t1[2:R + 2]
                gy = t2[2:R + 2] - t2[0:R]
                return jnp.abs(gx) + jnp.abs(gy)

            d = sobel_mag(padf_ref) - sobel_mag(padr_ref)
            dd = d * d
            if mask_rows:
                dd = jnp.where(r0 + base_rows < H, dd, 0.0)
            # No reshape before the reduce; accumulate into the resident block.
            out_ref[...] += jnp.sum(dd, keepdims=True)

        def plane(p):
            # Drop both planes (upcast after the load, so bf16 travels as bf16
            # on the HBM wire) into the zero-ringed scratches at offset (1,1).
            padf_ref[1:H + 1, 1:W + 1] = fuse_ref[p].astype(jnp.float32)
            padr_ref[1:H + 1, 1:W + 1] = ir_ref[p].astype(jnp.float32)
            if n_strips == 1:
                strip(0)
            else:
                def strip_body(s, carry):
                    strip(pl.multiple_of(s * R, 8))
                    return carry
                lax.fori_loop(0, n_strips, strip_body, 0)

        if P == 1:
            plane(0)
        else:
            def plane_body(p, carry):
                plane(p)
                return carry
            lax.fori_loop(0, P, plane_body, 0)

    return kernel


def gradient_loss(fuse_image, ir_image, *, target_block_bytes=4 << 20):
    """Matches Gradient_loss.forward: (1/N) * sum_i MSE(sobel(F_i), sobel(IR_i)).

    Every image shares the same C*H*W, so the batch-mean of per-image MSEs is
    exactly the global mean of (sobel(F) - sobel(IR))**2 over all N*C*H*W
    elements; the kernel therefore only emits per-block partial sums.
    """
    assert fuse_image.shape == ir_image.shape
    N, C, H, W = fuse_image.shape
    planes = N * C

    # NCHW -> (planes, H, W): free reshape, W stays the lane-dense last dim and
    # one grid step owns several whole planes.  Native dtype goes on the wire.
    fuse3 = fuse_image.reshape(planes, H, W)
    ir3 = ir_image.reshape(planes, H, W)

    num_cores = _num_tensorcores()
    plane_f32_bytes = H * W * 4
    P = _planes_per_block(planes, plane_f32_bytes, target_block_bytes, num_cores)
    num_blocks = planes // P

    # Per-plane halo scratch: image interior at rows [1, H+1), cols [1, W+1);
    # row 0 / col 0 / col W+1 / rows H+1..H_pad+1 form the zero ring.
    H_pad = _ceil_to(H, 8)                 # compute-domain rows (row-strip tiling)
    Hs = H_pad + 2
    Ws = _ceil_to(W + 2, 128)
    R = _strip_rows(H_pad, Ws)
    n_strips = H_pad // R
    # TODO(synk): for W < 128 (tiny images) lane utilization could be improved
    # by packing several planes side-by-side along the lane axis with gutters.

    kernel = _make_kernel(H=H, W=W, H_pad=H_pad, R=R, n_strips=n_strips)

    # Generation-aware VMEM budget: 2 inputs x 2 buffers x block (native dtype)
    # + two per-plane scratches + margin, clamped to physical capacity.
    block_in_bytes = P * H * W * fuse3.dtype.itemsize
    scratch_bytes = 2 * Hs * Ws * 4
    need = 8 * block_in_bytes + 2 * scratch_bytes + (2 << 20)
    vmem_cap = _vmem_capacity_bytes()
    vmem_limit = int(min(max(need, 32 << 20), 96 << 20,
                         max(vmem_cap - (8 << 20), 16 << 20)))

    partial = pl.pallas_call(
        kernel,
        out_shape=jax.ShapeDtypeStruct((num_blocks, 1), jnp.float32),
        grid=(num_blocks,),
        in_specs=[pl.BlockSpec((P, H, W), lambda b: (b, 0, 0)),
                  pl.BlockSpec((P, H, W), lambda b: (b, 0, 0))],
        out_specs=pl.BlockSpec((1, 1), lambda b: (b, 0)),
        scratch_shapes=[pltpu.VMEM((Hs, Ws), jnp.float32),
                        pltpu.VMEM((Hs, Ws), jnp.float32)],
        compiler_params=pltpu.CompilerParams(
            dimension_semantics=("parallel",),
            vmem_limit_bytes=vmem_limit),
    )(fuse3, ir3)

    return jnp.sum(partial) / (N * C * H * W)


def _reference_gradient_loss(fuse_image, ir_image):
    """Pure-JAX (non-Pallas) reference used only for validation in __main__."""
    def sobel_mag(x):
        H, W = x.shape[-2:]
        xp = jnp.pad(x.astype(jnp.float32), ((0, 0), (0, 0), (1, 1), (1, 1)))
        sl = lambda di, dj: xp[:, :, di:di + H, dj:dj + W]
        gx = ((sl(0, 2) - sl(0, 0)) + 2.0 * (sl(1, 2) - sl(1, 0))
              + (sl(2, 2) - sl(2, 0)))
        gy = ((sl(2, 0) - sl(0, 0)) + 2.0 * (sl(2, 1) - sl(0, 1))
              + (sl(2, 2) - sl(0, 2)))
        return jnp.abs(gx) + jnp.abs(gy)

    d = sobel_mag(fuse_image) - sobel_mag(ir_image)
    return jnp.mean(d * d)


if __name__ == "__main__":
    key = jax.random.PRNGKey(0)

    def check(shape, k):
        k1, k2 = jax.random.split(k)
        fuse = jax.random.uniform(k1, shape, dtype=jnp.float32)
        ir = jax.random.uniform(k2, shape, dtype=jnp.float32)
        loss = jax.jit(gradient_loss)(fuse, ir)
        jax.block_until_ready(loss)
        ref = _reference_gradient_loss(fuse, ir)
        np.testing.assert_allclose(np.asarray(loss), np.asarray(ref),
                                   rtol=1e-4, atol=1e-6)

    key, sub = jax.random.split(key)
    check((2, 4, 16, 16), sub)        # primary shape (single strip, no mask)
    key, sub = jax.random.split(key)
    check((1, 3, 72, 200), sub)       # multi-strip path (row tiling), W > 128
    key, sub = jax.random.split(key)
    check((2, 1, 19, 33), sub)        # H not multiple of 8 -> fake-row masking

    print("KERNEL_OK")
</pallas_src>

<mosaic_0001>
module attributes {stable_mosaic.version = 11 : i64} {
  func.func @kernel(%arg0: i32, %arg1: memref<8x16x16xf32, #tpu.memory_space<vmem>>, %arg2: memref<8x16x16xf32, #tpu.memory_space<vmem>>, %arg3: memref<1x1xf32, #tpu.memory_space<vmem>>, %arg4: memref<18x128xf32, #tpu.memory_space<vmem>>, %arg5: memref<18x128xf32, #tpu.memory_space<vmem>>) attributes {dimension_semantics = [#tpu.dimension_semantics<parallel>], iteration_bounds = array<i64: 1>, scalar_prefetch = 0 : i64, scratch_operands = 2 : i64, tpu.core_type = #tpu.core_type<tc>, window_params = [{transform_indices = @transform_0, window_bounds = array<i64: 8, 16, 16>}, {transform_indices = @transform_1, window_bounds = array<i64: 8, 16, 16>}, {transform_indices = @transform_2, window_bounds = array<i64: 1, 1>}]} {
    %cst = arith.constant 0.000000e+00 : f32
    %0 = vector.broadcast %cst : f32 to vector<1x128xf32>
    %c0 = arith.constant 0 : index
    %c0_0 = arith.constant 0 : index
    %1 = vector.load %arg4[%c0, %c0_0] : memref<18x128xf32, #tpu.memory_space<vmem>>, vector<1x128xf32>
    tpu.vector_store %arg4[%c0, %c0_0], %0 {strides = array<i32>} : memref<18x128xf32, #tpu.memory_space<vmem>>, vector<1x128xf32>,
    %cst_1 = arith.constant 0.000000e+00 : f32
    %2 = vector.broadcast %cst_1 : f32 to vector<1x128xf32>
    %c17 = arith.constant 17 : index
    %c0_2 = arith.constant 0 : index
    %3 = vector.load %arg4[%c17, %c0_2] : memref<18x128xf32, #tpu.memory_space<vmem>>, vector<1x128xf32>
    tpu.vector_store %arg4[%c17, %c0_2], %2 {strides = array<i32>} : memref<18x128xf32, #tpu.memory_space<vmem>>, vector<1x128xf32>,
    %cst_3 = arith.constant 0.000000e+00 : f32
    %4 = vector.broadcast %cst_3 : f32 to vector<18x1xf32>
    %c0_4 = arith.constant 0 : index
    %c0_5 = arith.constant 0 : index
    %5 = vector.load %arg4[%c0_4, %c0_5] : memref<18x128xf32, #tpu.memory_space<vmem>>, vector<18x1xf32>
    tpu.vector_store %arg4[%c0_4, %c0_5], %4 {strides = array<i32>} : memref<18x128xf32, #tpu.memory_space<vmem>>, vector<18x1xf32>,
    %cst_6 = arith.constant 0.000000e+00 : f32
    %6 = vector.broadcast %cst_6 : f32 to vector<18x1xf32>
    %c0_7 = arith.constant 0 : index
    %c17_8 = arith.constant 17 : index
    %7 = vector.load %arg4[%c0_7, %c17_8] : memref<18x128xf32, #tpu.memory_space<vmem>>, vector<18x1xf32>
    tpu.vector_store %arg4[%c0_7, %c17_8], %6 {strides = array<i32>} : memref<18x128xf32, #tpu.memory_space<vmem>>, vector<18x1xf32>,
    %cst_9 = arith.constant 0.000000e+00 : f32
    %8 = vector.broadcast %cst_9 : f32 to vector<1x128xf32>
    %c0_10 = arith.constant 0 : index
    %c0_11 = arith.constant 0 : index
    %9 = vector.load %arg5[%c0_10, %c0_11] : memref<18x128xf32, #tpu.memory_space<vmem>>, vector<1x128xf32>
    tpu.vector_store %arg5[%c0_10, %c0_11], %8 {strides = array<i32>} : memref<18x128xf32, #tpu.memory_space<vmem>>, vector<1x128xf32>,
    %cst_12 = arith.constant 0.000000e+00 : f32
    %10 = vector.broadcast %cst_12 : f32 to vector<1x128xf32>
    %c17_13 = arith.constant 17 : index
    %c0_14 = arith.constant 0 : index
    %11 = vector.load %arg5[%c17_13, %c0_14] : memref<18x128xf32, #tpu.memory_space<vmem>>, vector<1x128xf32>
    tpu.vector_store %arg5[%c17_13, %c0_14], %10 {strides = array<i32>} : memref<18x128xf32, #tpu.memory_space<vmem>>, vector<1x128xf32>,
    %cst_15 = arith.constant 0.000000e+00 : f32
    %12 = vector.broadcast %cst_15 : f32 to vector<18x1xf32>
    %c0_16 = arith.constant 0 : index
    %c0_17 = arith.constant 0 : index
    %13 = vector.load %arg5[%c0_16, %c0_17] : memref<18x128xf32, #tpu.memory_space<vmem>>, vector<18x1xf32>
    tpu.vector_store %arg5[%c0_16, %c0_17], %12 {strides = array<i32>} : memref<18x128xf32, #tpu.memory_space<vmem>>, vector<18x1xf32>,
    %cst_18 = arith.constant 0.000000e+00 : f32
    %14 = vector.broadcast %cst_18 : f32 to vector<18x1xf32>
    %c0_19 = arith.constant 0 : index
    %c17_20 = arith.constant 17 : index
    %15 = vector.load %arg5[%c0_19, %c17_20] : memref<18x128xf32, #tpu.memory_space<vmem>>, vector<18x1xf32>
    tpu.vector_store %arg5[%c0_19, %c17_20], %14 {strides = array<i32>} : memref<18x128xf32, #tpu.memory_space<vmem>>, vector<18x1xf32>,
    %cst_21 = arith.constant 0.000000e+00 : f32
    %16 = vector.broadcast %cst_21 : f32 to vector<1x1xf32>
    %c0_22 = arith.constant 0 : index
    %c0_23 = arith.constant 0 : index
    %17 = vector.load %arg3[%c0_22, %c0_23] : memref<1x1xf32, #tpu.memory_space<vmem>>, vector<1x1xf32>
    tpu.vector_store %arg3[%c0_22, %c0_23], %16 {strides = array<i32>} : memref<1x1xf32, #tpu.memory_space<vmem>>, vector<1x1xf32>,
    %c0_i32 = arith.constant 0 : i32
    %c8_i32 = arith.constant 8 : i32
    %18 = arith.addi %c0_i32, %c8_i32 : i32
    %c1_i32 = arith.constant 1 : i32
    scf.for %arg6 = %c0_i32 to %18 step %c1_i32  : i32 {
      %19 = arith.index_cast %arg6 : i32 to index
      %c0_25 = arith.constant 0 : index
      %c0_26 = arith.constant 0 : index
      %20 = vector.load %arg1[%19, %c0_25, %c0_26] : memref<8x16x16xf32, #tpu.memory_space<vmem>>, vector<1x16x16xf32>
      %21 = vector.shape_cast %20 : vector<1x16x16xf32> to vector<16x16xf32>
      %c1 = arith.constant 1 : index
      %c1_27 = arith.constant 1 : index
      %22 = vector.load %arg4[%c1, %c1_27] : memref<18x128xf32, #tpu.memory_space<vmem>>, vector<16x16xf32>
      tpu.vector_store %arg4[%c1, %c1_27], %21 {strides = array<i32>} : memref<18x128xf32, #tpu.memory_space<vmem>>, vector<16x16xf32>,
      %23 = arith.index_cast %arg6 : i32 to index
      %c0_28 = arith.constant 0 : index
      %c0_29 = arith.constant 0 : index
      %24 = vector.load %arg2[%23, %c0_28, %c0_29] : memref<8x16x16xf32, #tpu.memory_space<vmem>>, vector<1x16x16xf32>
      %25 = vector.shape_cast %24 : vector<1x16x16xf32> to vector<16x16xf32>
      %c1_30 = arith.constant 1 : index
      %c1_31 = arith.constant 1 : index
      %26 = vector.load %arg5[%c1_30, %c1_31] : memref<18x128xf32, #tpu.memory_space<vmem>>, vector<16x16xf32>
      tpu.vector_store %arg5[%c1_30, %c1_31], %25 {strides = array<i32>} : memref<18x128xf32, #tpu.memory_space<vmem>>, vector<16x16xf32>,
      %c0_32 = arith.constant 0 : index
      %c0_33 = arith.constant 0 : index
      %27 = vector.load %arg4[%c0_32, %c0_33] : memref<18x128xf32, #tpu.memory_space<vmem>>, vector<18x18xf32>
      %28 = vector.extract_strided_slice %27 {offsets = [0, 0], sizes = [18, 16], strides = [1, 1]} : vector<18x18xf32> to vector<18x16xf32>
      %29 = vector.extract_strided_slice %27 {offsets = [0, 1], sizes = [18, 16], strides = [1, 1]} : vector<18x18xf32> to vector<18x16xf32>
      %30 = vector.extract_strided_slice %27 {offsets = [0, 2], sizes = [18, 16], strides = [1, 1]} : vector<18x18xf32> to vector<18x16xf32>
      %31 = arith.subf %30, %28 : vector<18x16xf32>
      %cst_34 = arith.constant 2.000000e+00 : f32
      %32 = vector.broadcast %cst_34 : f32 to vector<18x16xf32>
      %33 = arith.mulf %32, %29 : vector<18x16xf32>
      %34 = arith.addf %28, %33 : vector<18x16xf32>
      %35 = arith.addf %34, %30 : vector<18x16xf32>
      %36 = vector.extract_strided_slice %31 {offsets = [0, 0], sizes = [16, 16], strides = [1, 1]} : vector<18x16xf32> to vector<16x16xf32>
      %37 = vector.extract_strided_slice %31 {offsets = [1, 0], sizes = [16, 16], strides = [1, 1]} : vector<18x16xf32> to vector<16x16xf32>
      %cst_35 = arith.constant 2.000000e+00 : f32
      %38 = vector.broadcast %cst_35 : f32 to vector<16x16xf32>
      %39 = arith.mulf %38, %37 : vector<16x16xf32>
      %40 = arith.addf %36, %39 : vector<16x16xf32>
      %41 = vector.extract_strided_slice %31 {offsets = [2, 0], sizes = [16, 16], strides = [1, 1]} : vector<18x16xf32> to vector<16x16xf32>
      %42 = arith.addf %40, %41 : vector<16x16xf32>
      %43 = vector.extract_strided_slice %35 {offsets = [2, 0], sizes = [16, 16], strides = [1, 1]} : vector<18x16xf32> to vector<16x16xf32>
      %44 = vector.extract_strided_slice %35 {offsets = [0, 0], sizes = [16, 16], strides = [1, 1]} : vector<18x16xf32> to vector<16x16xf32>
      %45 = arith.subf %43, %44 : vector<16x16xf32>
      %46 = math.absf %42 : vector<16x16xf32>
      %47 = math.absf %45 : vector<16x16xf32>
      %48 = arith.addf %46, %47 : vector<16x16xf32>
      %c0_36 = arith.constant 0 : index
      %c0_37 = arith.constant 0 : index
      %49 = vector.load %arg5[%c0_36, %c0_37] : memref<18x128xf32, #tpu.memory_space<vmem>>, vector<18x18xf32>
      %50 = vector.extract_strided_slice %49 {offsets = [0, 0], sizes = [18, 16], strides = [1, 1]} : vector<18x18xf32> to vector<18x16xf32>
      %51 = vector.extract_strided_slice %49 {offsets = [0, 1], sizes = [18, 16], strides = [1, 1]} : vector<18x18xf32> to vector<18x16xf32>
      %52 = vector.extract_strided_slice %49 {offsets = [0, 2], sizes = [18, 16], strides = [1, 1]} : vector<18x18xf32> to vector<18x16xf32>
      %53 = arith.subf %52, %50 : vector<18x16xf32>
      %cst_38 = arith.constant 2.000000e+00 : f32
      %54 = vector.broadcast %cst_38 : f32 to vector<18x16xf32>
      %55 = arith.mulf %54, %51 : vector<18x16xf32>
      %56 = arith.addf %50, %55 : vector<18x16xf32>
      %57 = arith.addf %56, %52 : vector<18x16xf32>
      %58 = vector.extract_strided_slice %53 {offsets = [0, 0], sizes = [16, 16], strides = [1, 1]} : vector<18x16xf32> to vector<16x16xf32>
      %59 = vector.extract_strided_slice %53 {offsets = [1, 0], sizes = [16, 16], strides = [1, 1]} : vector<18x16xf32> to vector<16x16xf32>
      %cst_39 = arith.constant 2.000000e+00 : f32
      %60 = vector.broadcast %cst_39 : f32 to vector<16x16xf32>
      %61 = arith.mulf %60, %59 : vector<16x16xf32>
      %62 = arith.addf %58, %61 : vector<16x16xf32>
      %63 = vector.extract_strided_slice %53 {offsets = [2, 0], sizes = [16, 16], strides = [1, 1]} : vector<18x16xf32> to vector<16x16xf32>
      %64 = arith.addf %62, %63 : vector<16x16xf32>
      %65 = vector.extract_strided_slice %57 {offsets = [2, 0], sizes = [16, 16], strides = [1, 1]} : vector<18x16xf32> to vector<16x16xf32>
      %66 = vector.extract_strided_slice %57 {offsets = [0, 0], sizes = [16, 16], strides = [1, 1]} : vector<18x16xf32> to vector<16x16xf32>
      %67 = arith.subf %65, %66 : vector<16x16xf32>
      %68 = math.absf %64 : vector<16x16xf32>
      %69 = math.absf %67 : vector<16x16xf32>
      %70 = arith.addf %68, %69 : vector<16x16xf32>
      %71 = arith.subf %48, %70 : vector<16x16xf32>
      %72 = arith.mulf %71, %71 : vector<16x16xf32>
      %c0_40 = arith.constant 0 : index
      %c0_41 = arith.constant 0 : index
      %73 = vector.load %arg3[%c0_40, %c0_41] : memref<1x1xf32, #tpu.memory_space<vmem>>, vector<1x1xf32>
      %74 = vector.shape_cast %72 : vector<16x16xf32> to vector<1x16x16xf32>
      %cst_42 = arith.constant dense<0.000000e+00> : vector<1xf32>
      %75 = vector.multi_reduction <add>, %74, %cst_42 [1, 2] : vector<1x16x16xf32> to vector<1xf32>
      %76 = vector.shape_cast %75 : vector<1xf32> to vector<1x1x1xf32>
      %77 = vector.extract %76[0, 0, 0] : f32 from vector<1x1x1xf32>
      %78 = vector.broadcast %77 : f32 to vector<1x1xf32>
      %79 = arith.addf %73, %78 : vector<1x1xf32>
      %c0_43 = arith.constant 0 : index
      %c0_44 = arith.constant 0 : index
      %80 = vector.load %arg3[%c0_43, %c0_44] : memref<1x1xf32, #tpu.memory_space<vmem>>, vector<1x1xf32>
      tpu.vector_store %arg3[%c0_43, %c0_44], %79 {strides = array<i32>} : memref<1x1xf32, #tpu.memory_space<vmem>>, vector<1x1xf32>,
    }
    %c8_i32_24 = arith.constant 8 : i32
    return
  }
  func.func @transform_0(%arg0: i32) -> (i32, i32, i32) {
    %c0_i32 = arith.constant 0 : i32
    %c0_i32_0 = arith.constant 0 : i32
    %c0_i32_1 = arith.constant 0 : i32
    return %arg0, %c0_i32, %c0_i32_0 : i32, i32, i32
  }
  func.func @transform_1(%arg0: i32) -> (i32, i32, i32) {
    %c0_i32 = arith.constant 0 : i32
    %c0_i32_0 = arith.constant 0 : i32
    %c0_i32_1 = arith.constant 0 : i32
    return %arg0, %c0_i32, %c0_i32_0 : i32, i32, i32
  }
  func.func @transform_2(%arg0: i32) -> (i32, i32) {
    %c0_i32 = arith.constant 0 : i32
    %c0_i32_0 = arith.constant 0 : i32
    return %arg0, %c0_i32 : i32, i32
  }
}

</mosaic_0001>

<llo_original>
// kernel: gradient_loss.1
$region0: #{gradient_loss.1}
  #allocation0 [shape = 'u32[]', space=smem, size = 0x4, offset = 0x4, fixed_abs, tag = 'smem constant byte address 0x4 - core index']
  #allocation1 [shape = 'u32[144,128]{1,0:T(1,128)}', space=vmem, size = 0x12000, scoped, tag = 'internal scratch']
  #allocation2 [shape = 'f32[18,128]{1,0:T(8,128)}', space=vmem, size = 0x3000, scoped, tag = 'scratch operand']
  #allocation3 [shape = 'f32[18,128]{1,0:T(8,128)}', space=vmem, size = 0x3000, scoped, tag = 'scratch operand']
  %s0 = inlined_call_operand.hbm [shape: f32[8,16,16], index: 0, kind: input, shape index: {}]
  %s1 = inlined_call_operand.hbm [shape: f32[8,16,16], index: 1, kind: input, shape index: {}]
  %s2 = inlined_call_operand.hbm [shape: f32[1,1], index: 2, kind: output, shape index: {}]
  %s3 = sld [smem:[#allocation0]]
  $region33: #{gradient_loss.1} parent=0
    _
  %s5 = ssub.s32 1, %s3
  %s6 = scalar_select 0, %s5, %s3
  $region1: #{gradient_loss.1} parent=0
    #allocation4 [shape = 'u8[65536]{0}', space=vmem, size = 0x10000, scoped, tag = 'input window, operand 0, single buffered']
    #allocation5 [shape = 's32[1]{0}', space=sflag, size = 0x4, scoped, tag = 'scoped memory for gradient_loss.1']
    #allocation6 [shape = 's32[1]{0}', space=sflag, size = 0x4, scoped, tag = 'scoped memory for gradient_loss.1']
    #allocation7 [shape = 'u8[65536]{0}', space=vmem, size = 0x10000, scoped, tag = 'input window, operand 1, single buffered']
    #allocation8 [shape = 's32[1]{0}', space=sflag, size = 0x4, scoped, tag = 'scoped memory for gradient_loss.1']
    #allocation9 [shape = 'u8[512]{0}', space=vmem, size = 0x400, scoped, tag = 'output window, operand 0, single buffered']
    %7 = vsyncpa [#allocation5], 0
    %8 = vsyncpa [#allocation8], 0
    %9 = vsyncpa [#allocation6], 0
    // Predicated region
    $region2: #{gradient_loss.1} parent=1 // pred_check
      _
    $region3: #{gradient_loss.1} parent=1 // pred_check_branch
      %11 = sbr.rel (0) target = $region5
    $region4: #{gradient_loss.1} parent=1 // pred_region
      %s13 = ssub.s32 2048, 2048
      %14 = vsyncadd [#allocation5], %s13
      %s15 = sshll.u32 [#allocation4], 4
      %s16 = int_to_ptr.vmem [resolvable:$true] %s15
      %21 = dma.hbm_to_vmem [thread:$0]  %s0, 2048, %s16, [#allocation5], 128, 128, 8
    $region5: #{gradient_loss.1} parent=1 // pred_fallthru
      _
    // Predicated region
    $region6: #{gradient_loss.1} parent=1 // pred_check
      _
    $region7: #{gradient_loss.1} parent=1 // pred_check_branch
      %23 = sbr.rel (0) target = $region9
    $region8: #{gradient_loss.1} parent=1 // pred_region
      %s25 = ssub.s32 2048, 2048
      %26 = vsyncadd [#allocation8], %s25
      %s27 = sshll.u32 [#allocation7], 4
      %s28 = int_to_ptr.vmem [resolvable:$true] %s27
      %33 = dma.hbm_to_vmem [thread:$0]  %s1, 2048, %s28, [#allocation8], 128, 128, 8
    $region9: #{gradient_loss.1} parent=1 // pred_fallthru
      _
    // Predicated region
    $region10: #{gradient_loss.1} parent=1 // pred_check
      _
    $region11: #{gradient_loss.1} parent=1 // pred_check_branch
      %35 = sbr.rel (0) target = $region13
    $region12: #{gradient_loss.1} parent=1 // pred_region
      %36 = dma.done [#allocation5], 2048
    $region13: #{gradient_loss.1} parent=1 // pred_fallthru
      _
    // Predicated region
    $region14: #{gradient_loss.1} parent=1 // pred_check
      _
    $region15: #{gradient_loss.1} parent=1 // pred_check_branch
      %38 = sbr.rel (0) target = $region17
    $region16: #{gradient_loss.1} parent=1 // pred_region
      %39 = dma.done [#allocation8], 2048
    $region17: #{gradient_loss.1} parent=1 // pred_fallthru
      _
    %40 = vst [vmem:[#allocation2] sm:$0x1] 0.0
    %41 = vst [vmem:[#allocation2 + $0x11] sm:$0x1] 0.0
    %vm42 = vcmask 7168
    %43 = vst.msk [vmem:[#allocation2] sm:$0xff] %vm42, 0.0
    %44 = vst.msk [vmem:[#allocation2 + $0x8] sm:$0xff] %vm42, 0.0
    %vm45 = vcmask 1024
    %46 = vst.msk [vmem:[#allocation2 + $0x10] sm:$0x3] %vm45, 0.0
    %vm47 = vcmask 146568
    %48 = vst.msk [vmem:[#allocation2] sm:$0xff] %vm47, 0.0
    %49 = vst.msk [vmem:[#allocation2 + $0x8] sm:$0xff] %vm47, 0.0
    %vm50 = vcmask 140424
    %51 = vst.msk [vmem:[#allocation2 + $0x10] sm:$0x3] %vm50, 0.0
    %52 = vst [vmem:[#allocation3] sm:$0x1] 0.0
    %53 = vst [vmem:[#allocation3 + $0x11] sm:$0x1] 0.0
    %54 = vst.msk [vmem:[#allocation3] sm:$0xff] %vm42, 0.0
    %55 = vst.msk [vmem:[#allocation3 + $0x8] sm:$0xff] %vm42, 0.0
    %56 = vst.msk [vmem:[#allocation3 + $0x10] sm:$0x3] %vm45, 0.0
    %57 = vst.msk [vmem:[#allocation3] sm:$0xff] %vm47, 0.0
    %58 = vst.msk [vmem:[#allocation3 + $0x8] sm:$0xff] %vm47, 0.0
    %59 = vst.msk [vmem:[#allocation3 + $0x10] sm:$0x3] %vm50, 0.0
    %vm60 = vcmask 0
    %61 = vst.msk [vmem:[#allocation9] sm:$0x1] %vm60, 0.0
    loop: start=0, step=1, limit=8
    $region18: #{gradient_loss.1} parent=1 // loop_pre_header
      _
    $region19: #{gradient_loss.1} parent=1 // loop_header
      %s63 = sphi 0, %s67
      %p64 = scmp.ge.s32.totalorder %s63, 8
    $region20: #{gradient_loss.1} parent=1 // loop_header_branch
      %66 = sbr.rel (%p64) target = $region24
    $region21: #{gradient_loss.1} parent=1 // loop_body
      %s68 = smul.u32 %s63, 16
      %s69 = scalar_lea.vmem [#allocation4], %s68
      %v70 = vld [vmem:[%s69] sm:$0xff]
      %v71 = vld [vmem:[%s69 + $0x8] sm:$0xff]
      %74 = vrot.lane.b32.xlu0 %v70, 1
      %v75 = vpop.permute.xlu0 %74
      %76 = vrot.lane.b32.xlu0 %v71, 1
      %v77 = vpop.permute.xlu0 %76
      %vm80 = vcmask 138248
      %81 = vst.msk [vmem:[#allocation2 + $0x1] sm:$0xff] %vm80, %v75
      %82 = vst.msk [vmem:[#allocation2 + $0x9] sm:$0xff] %vm80, %v77
      %s83 = scalar_lea.vmem [#allocation7], %s68
      %v84 = vld [vmem:[%s83] sm:$0xff]
      %v85 = vld [vmem:[%s83 + $0x8] sm:$0xff]
      %88 = vrot.lane.b32.xlu0 %v84, 1
      %v89 = vpop.permute.xlu0 %88
      %90 = vrot.lane.b32.xlu0 %v85, 1
      %v91 = vpop.permute.xlu0 %90
      %94 = vst.msk [vmem:[#allocation3 + $0x1] sm:$0xff] %vm80, %v89
      %95 = vst.msk [vmem:[#allocation3 + $0x9] sm:$0xff] %vm80, %v91
      %v96 = vld [vmem:[#allocation2] sm:$0xff]
      %v97 = vld [vmem:[#allocation2 + $0x8] sm:$0xff]
      %v98 = vld [vmem:[#allocation2 + $0x10] sm:$0x3]
      %102 = vrot.lane.b32.xlu0 %v96, 2
      %v103 = vpop.permute.xlu0 %102
      %104 = vrot.lane.b32.xlu0 %v97, 2
      %v105 = vpop.permute.xlu0 %104
      %106 = vrot.lane.b32.xlu0 %v98, 2
      %v107 = vpop.permute.xlu0 %106
      %v111 = vsub.f32 %v96, %v103
      %v112 = vsub.f32 %v97, %v105
      %v113 = vsub.f32 %v98, %v107
      %v114 = vmul.f32 %v96, 2.0
      %v115 = vmul.f32 %v97, 2.0
      %v116 = vmul.f32 %v98, 2.0
      %120 = vrot.lane.b32.xlu0 %v114, 127
      %v121 = vpop.permute.xlu0 %120
      %122 = vrot.lane.b32.xlu0 %v115, 127
      %v123 = vpop.permute.xlu0 %122
      %124 = vrot.lane.b32.xlu0 %v116, 127
      %v125 = vpop.permute.xlu0 %124
      %v129 = vadd.f32 %v96, %v121
      %v130 = vadd.f32 %v97, %v123
      %v131 = vadd.f32 %v98, %v125
      %132 = vrot.lane.b32.xlu0 %v96, 126
      %v133 = vpop.permute.xlu0 %132
      %134 = vrot.lane.b32.xlu0 %v97, 126
      %v135 = vpop.permute.xlu0 %134
      %136 = vrot.lane.b32.xlu0 %v98, 126
      %v137 = vpop.permute.xlu0 %136
      %v141 = vadd.f32 %v129, %v133
      %v142 = vadd.f32 %v130, %v135
      %v143 = vadd.f32 %v131, %v137
      %v144 = vmul.f32 %v111, 2.0
      %v145 = vmul.f32 %v112, 2.0
      %v146 = vmul.f32 %v113, 2.0
      %vm150 = vcmask 1046528
      %v151 = vrot.slane %v144, 1
      %v152 = vrot.slane %v145, 1
      %v153 = vsel %vm150, %v151, %v152
      %v154 = vrot.slane %v146, 1
      %v155 = vsel %vm150, %v152, %v154
      %v158 = vadd.f32 %v111, %v153
      %v159 = vadd.f32 %v112, %v155
      %vm163 = vcmask 1045504
      %v164 = vrot.slane %v111, 2
      %v165 = vrot.slane %v112, 2
      %v166 = vsel %vm163, %v164, %v165
      %v167 = vrot.slane %v113, 2
      %v168 = vsel %vm163, %v165, %v167
      %v171 = vadd.f32 %v158, %v166
      %v172 = vadd.f32 %v159, %v168
      %vm175 = vcmask 1041408
      %v176 = vrot.slane %v141, 6
      %v177 = vrot.slane %v142, 6
      %v178 = vsel %vm175, %v176, %v177
      %v182 = vsub.f32 %v141, %v176
      %v183 = vsub.f32 %v142, %v178
      %v184 = vsub.f32 %v143, %v177
      %v185 = vand.u32 2147483647, %v171
      %v186 = vand.u32 2147483647, %v172
      %v187 = vand.u32 2147483647, %v182
      %v188 = vand.u32 2147483647, %v183
      %v189 = vand.u32 2147483647, %v184
      %v193 = vrot.slane %v187, 2
      %v194 = vrot.slane %v188, 2
      %v195 = vsel %vm163, %v193, %v194
      %v196 = vrot.slane %v189, 2
      %v197 = vsel %vm163, %v194, %v196
      %198 = vrot.lane.b32.xlu0 %v195, 2
      %v199 = vpop.permute.xlu0 %198
      %200 = vrot.lane.b32.xlu0 %v197, 2
      %v201 = vpop.permute.xlu0 %200
      %v204 = vadd.f32 %v185, %v199
      %v205 = vadd.f32 %v186, %v201
      %v206 = vld [vmem:[#allocation3] sm:$0xff]
      %v207 = vld [vmem:[#allocation3 + $0x8] sm:$0xff]
      %v208 = vld [vmem:[#allocation3 + $0x10] sm:$0x3]
      %212 = vrot.lane.b32.xlu0 %v206, 2
      %v213 = vpop.permute.xlu0 %212
      %214 = vrot.lane.b32.xlu0 %v207, 2
      %v215 = vpop.permute.xlu0 %214
      %216 = vrot.lane.b32.xlu0 %v208, 2
      %v217 = vpop.permute.xlu0 %216
      %v221 = vsub.f32 %v206, %v213
      %v222 = vsub.f32 %v207, %v215
      %v223 = vsub.f32 %v208, %v217
      %v224 = vmul.f32 %v206, 2.0
      %v225 = vmul.f32 %v207, 2.0
      %v226 = vmul.f32 %v208, 2.0
      %230 = vrot.lane.b32.xlu0 %v224, 127
      %v231 = vpop.permute.xlu0 %230
      %232 = vrot.lane.b32.xlu0 %v225, 127
      %v233 = vpop.permute.xlu0 %232
      %234 = vrot.lane.b32.xlu0 %v226, 127
      %v235 = vpop.permute.xlu0 %234
      %v239 = vadd.f32 %v206, %v231
      %v240 = vadd.f32 %v207, %v233
      %v241 = vadd.f32 %v208, %v235
      %242 = vrot.lane.b32.xlu0 %v206, 126
      %v243 = vpop.permute.xlu0 %242
      %244 = vrot.lane.b32.xlu0 %v207, 126
      %v245 = vpop.permute.xlu0 %244
      %246 = vrot.lane.b32.xlu0 %v208, 126
      %v247 = vpop.permute.xlu0 %246
      %v251 = vadd.f32 %v239, %v243
      %v252 = vadd.f32 %v240, %v245
      %v253 = vadd.f32 %v241, %v247
      %v254 = vmul.f32 %v221, 2.0
      %v255 = vmul.f32 %v222, 2.0
      %v256 = vmul.f32 %v223, 2.0
      %v260 = vrot.slane %v254, 1
      %v261 = vrot.slane %v255, 1
      %v262 = vsel %vm150, %v260, %v261
      %v263 = vrot.slane %v256, 1
      %v264 = vsel %vm150, %v261, %v263
      %v267 = vadd.f32 %v221, %v262
      %v268 = vadd.f32 %v222, %v264
      %v272 = vrot.slane %v221, 2
      %v273 = vrot.slane %v222, 2
      %v274 = vsel %vm163, %v272, %v273
      %v275 = vrot.slane %v223, 2
      %v276 = vsel %vm163, %v273, %v275
      %v279 = vadd.f32 %v267, %v274
      %v280 = vadd.f32 %v268, %v276
      %v283 = vrot.slane %v251, 6
      %v284 = vrot.slane %v252, 6
      %v285 = vsel %vm175, %v283, %v284
      %v289 = vsub.f32 %v251, %v283
      %v290 = vsub.f32 %v252, %v285
      %v291 = vsub.f32 %v253, %v284
      %v292 = vand.u32 2147483647, %v279
      %v293 = vand.u32 2147483647, %v280
      %v294 = vand.u32 2147483647, %v289
      %v295 = vand.u32 2147483647, %v290
      %v296 = vand.u32 2147483647, %v291
      %v300 = vrot.slane %v294, 2
      %v301 = vrot.slane %v295, 2
      %v302 = vsel %vm163, %v300, %v301
      %v303 = vrot.slane %v296, 2
      %v304 = vsel %vm163, %v301, %v303
      %305 = vrot.lane.b32.xlu0 %v302, 2
      %v306 = vpop.permute.xlu0 %305
      %307 = vrot.lane.b32.xlu0 %v304, 2
      %v308 = vpop.permute.xlu0 %307
      %v311 = vadd.f32 %v292, %v306
      %v312 = vadd.f32 %v293, %v308
      %v313 = vsub.f32 %v204, %v311
      %v314 = vsub.f32 %v205, %v312
      %v315 = vmul.f32 %v313, %v313
      %v316 = vmul.f32 %v314, %v314
      %v317 = vld [vmem:[#allocation9] sm:$0x1]
      %320 = vrot.lane.b32.xlu0 %v315, 126
      %v321 = vpop.permute.xlu0 %320
      %322 = vrot.lane.b32.xlu0 %v316, 126
      %v323 = vpop.permute.xlu0 %322
      %vm326 = vcmask 130048
      %v327 = vsel %vm326, %v321, 0.0
      %v328 = vsel %vm326, %v323, 0.0
      %v329 = vadd.f32 %v327, %v328
      %330 = vadd.xlane.f32.xlu0 %v329
      %v331 = vpop.xlane.xlu0 %330
      %v332 = vrot.slane %v331, 4
      %v333 = vadd.f32 %v331, %v332
      %v334 = vrot.slane %v333, 2
      %v335 = vadd.f32 %v333, %v334
      %v336 = vrot.slane %v335, 1
      %v337 = vadd.f32 %v335, %v336
      %s338 = vtos %v337
      %v339 = vstv %s338
      %v340 = vadd.f32 %v317, %v339
      %341 = vst.msk [vmem:[#allocation9] sm:$0x1] %vm60, %v340
    $region22: #{gradient_loss.1} parent=1 // loop_footer
      %s67 = sadd.s32 1, %s63
    $region23: #{gradient_loss.1} parent=1 // loop_footer_branch
      %62 = sbr.rel target = $region19
    $region24: #{gradient_loss.1} parent=1 // loop_exit
      _
    // Predicated region
    $region25: #{gradient_loss.1} parent=1 // pred_check
      _
    $region26: #{gradient_loss.1} parent=1 // pred_check_branch
      %343 = sbr.rel (0) target = $region28
    $region27: #{gradient_loss.1} parent=1 // pred_region
      %s345 = ssub.s32 16, 16
      %346 = vsyncadd [#allocation6], %s345
      %s348 = sshll.u32 [#allocation9], 4
      %s349 = int_to_ptr.vmem [resolvable:$true] %s348
      %351 = dma.vmem_to_hbm [thread:$0]  %s349, 16, %s2, [#allocation6]
    $region28: #{gradient_loss.1} parent=1 // pred_fallthru
      _
    // Predicated region
    $region29: #{gradient_loss.1} parent=1 // pred_check
      _
    $region30: #{gradient_loss.1} parent=1 // pred_check_branch
      %353 = sbr.rel (0) target = $region32
    $region31: #{gradient_loss.1} parent=1 // pred_region
      %354 = dma.done [#allocation6], 16
    $region32: #{gradient_loss.1} parent=1 // pred_fallthru
      _
    %355 = vsyncpa [#allocation5], 1
    %356 = vsyncpa [#allocation8], 1
    %357 = vsyncpa [#allocation6], 1

</llo_original>
